<compile_context>
chip_gen: v6e
topology: v6e:2x2x1
jax: 0.10.0
libtpu: 0.0.40
codegen_flags: <defaults>
</compile_context>

<pallas_src>
import functools

import jax
import jax.numpy as jnp
from jax import lax
from jax.experimental import pallas as pl
from jax.experimental.pallas import tpu as pltpu


def _silu(v):
    return v * jax.nn.sigmoid(v)


def _round_up(n, m):
    return (n + m - 1) // m * m


def mlp_ln_act_kernel(xc_ref, w_ref, bias_ref, gamma_ref, beta_ref, o_ref, *,
                      c_in, c_out, n_pad, eps):
    # xc tile: (B_tile, C_in + C_cond) f32; first c_in columns are x, rest cond.
    xc = xc_ref[...].astype(jnp.float32)

    # SiLU only on the cond columns (the nn.Sequential(act, linear_emb) path).
    col = lax.broadcasted_iota(jnp.int32, xc.shape, dimension=1)
    xc = jnp.where(col >= c_in, xc * jax.nn.sigmoid(xc), xc)

    # Single fused MXU push against the block-diagonal packed weight:
    #   columns [0, n_pad)        -> x @ W        (zero-padded beyond c_out)
    #   columns [n_pad, 2*n_pad)  -> silu(cond) @ We
    # bf16 operands, f32 accumulation.
    hc = jnp.dot(xc.astype(jnp.bfloat16), w_ref[...],
                 preferred_element_type=jnp.float32)
    hc = hc + bias_ref[...]          # [b | be + condition_bias], read once

    h = hc[:, :n_pad]                # clean vreg-boundary split (128 lanes)
    c = hc[:, n_pad:]
    h = h * c                        # modulation; padded lanes stay exactly 0

    # LayerNorm over the TRUE c_out features (eps=1e-5, affine).
    # Padded lanes of h are exactly zero, so plain sums are correct as long as
    # we divide by c_out (not n_pad) and mask padded lanes out of the variance.
    lane = lax.broadcasted_iota(jnp.int32, h.shape, dimension=1)
    valid = lane < c_out
    inv_n = jnp.float32(1.0 / c_out)
    mean = jnp.sum(h, axis=-1, keepdims=True) * inv_n
    centered = jnp.where(valid, h - mean, 0.0)
    var = jnp.sum(centered * centered, axis=-1, keepdims=True) * inv_n
    hn = centered * lax.rsqrt(var + eps)
    hn = hn * gamma_ref[...] + beta_ref[...]   # padded gamma/beta are 0

    # Output activation (SiLU); dropout p=0 -> Identity. Padded lanes: silu(0)=0.
    o_ref[...] = (hn * jax.nn.sigmoid(hn)).astype(o_ref.dtype)


def mlp_ln_act(x, cond, packed, *, c_out, n_pad=128, b_tile_max=1024, eps=1e-5):
    """Fused MLPLNAct forward. Returns (B, c_out)."""
    B, c_in = x.shape
    k = c_in + cond.shape[1]

    b_tile = min(b_tile_max, _round_up(B, 8))
    b_pad = _round_up(B, b_tile)

    # Pre-concatenate [x, cond] along the feature axis (layout plumbing; silu
    # on the cond columns happens inside the kernel).
    xc = jnp.concatenate([x, cond], axis=-1)
    if b_pad != B:
        xc = jnp.pad(xc, ((0, b_pad - B), (0, 0)))

    kernel = functools.partial(mlp_ln_act_kernel, c_in=c_in, c_out=c_out,
                               n_pad=n_pad, eps=eps)

    out = pl.pallas_call(
        kernel,
        out_shape=jax.ShapeDtypeStruct((b_pad, n_pad), x.dtype),
        grid=(b_pad // b_tile,),
        in_specs=[
            # batch-tiled activations
            pl.BlockSpec((b_tile, k), lambda i: (i, 0)),
            # VMEM-resident packed weights / biases / LN affine params
            pl.BlockSpec((k, 2 * n_pad), lambda i: (0, 0)),
            pl.BlockSpec((1, 2 * n_pad), lambda i: (0, 0)),
            pl.BlockSpec((1, n_pad), lambda i: (0, 0)),
            pl.BlockSpec((1, n_pad), lambda i: (0, 0)),
        ],
        out_specs=pl.BlockSpec((b_tile, n_pad), lambda i: (i, 0)),
        compiler_params=pltpu.CompilerParams(
            dimension_semantics=("parallel",)),
    )(xc, packed["w_cat"], packed["bias_cat"], packed["gamma"], packed["beta"])

    return out[:B, :c_out]


def init_params(key, in_channels, out_channels, cond_channels):
    """Deterministic synthetic init mirroring the module (silu -> kaiming)."""
    k1, k2, k3, k4 = jax.random.split(key, 4)
    std_w = (2.0 / in_channels) ** 0.5
    std_we = (2.0 / cond_channels) ** 0.5
    bound_b = 1.0 / (in_channels ** 0.5)
    bound_be = 1.0 / (cond_channels ** 0.5)
    # Weights stored pre-transposed as (in, out) so the kernel does x @ w.
    return {
        "w": jax.random.normal(k1, (in_channels, out_channels), jnp.float32) * std_w,
        "b": jax.random.uniform(k2, (1, out_channels), jnp.float32, -bound_b, bound_b),
        "we": jax.random.normal(k3, (cond_channels, out_channels), jnp.float32) * std_we,
        "be": jax.random.uniform(k4, (1, out_channels), jnp.float32, -bound_be, bound_be),
        "gamma": jnp.ones((1, out_channels), jnp.float32),
        "beta": jnp.zeros((1, out_channels), jnp.float32),
    }


def pack_params(params, *, c_in, c_cond, c_out, n_pad=128, condition_bias=1.0):
    """One-time packing: block-diagonal stacked bf16 weight, lane-padded biases
    (condition_bias folded into the cond-path bias) and LN affine params."""
    k = c_in + c_cond
    w_cat = jnp.zeros((k, 2 * n_pad), jnp.float32)
    w_cat = w_cat.at[:c_in, :c_out].set(params["w"])
    w_cat = w_cat.at[c_in:, n_pad:n_pad + c_out].set(params["we"])

    bias_cat = jnp.zeros((1, 2 * n_pad), jnp.float32)
    bias_cat = bias_cat.at[:, :c_out].set(params["b"])
    bias_cat = bias_cat.at[:, n_pad:n_pad + c_out].set(params["be"] + condition_bias)

    gamma = jnp.zeros((1, n_pad), jnp.float32).at[:, :c_out].set(params["gamma"])
    beta = jnp.zeros((1, n_pad), jnp.float32).at[:, :c_out].set(params["beta"])

    return {
        "w_cat": w_cat.astype(jnp.bfloat16),  # bf16 MXU operand
        "bias_cat": bias_cat,
        "gamma": gamma,
        "beta": beta,
    }


def mlp_ln_act_ref(x, cond, params, *, condition_bias=1.0, eps=1e-5,
                   mxu_dtype=jnp.float32):
    """Pure-JAX reference of the PyTorch forward. `mxu_dtype=bf16` mirrors the
    kernel's matmul precision (bf16 operands, f32 accumulation)."""
    w = params["w"].astype(mxu_dtype)
    we = params["we"].astype(mxu_dtype)
    h = jnp.dot(x.astype(mxu_dtype), w,
                preferred_element_type=jnp.float32) + params["b"]
    c = _silu(cond)
    c = jnp.dot(c.astype(mxu_dtype), we,
                preferred_element_type=jnp.float32) + params["be"]
    h = h * (condition_bias + c)
    mean = jnp.mean(h, axis=-1, keepdims=True)
    var = jnp.mean((h - mean) ** 2, axis=-1, keepdims=True)
    h = (h - mean) * lax.rsqrt(var + eps)
    h = h * params["gamma"] + params["beta"]
    return _silu(h)


if __name__ == "__main__":
    B, C_IN, C_OUT, C_COND = 8, 32, 32, 16
    COND_BIAS = 1.0

    key = jax.random.PRNGKey(0)
    kx, kc, kp = jax.random.split(key, 3)
    x = jax.random.normal(kx, (B, C_IN), jnp.float32)
    cond = jax.random.normal(kc, (B, C_COND), jnp.float32)
    params = init_params(kp, C_IN, C_OUT, C_COND)
    packed = pack_params(params, c_in=C_IN, c_cond=C_COND, c_out=C_OUT,
                         condition_bias=COND_BIAS)

    out = mlp_ln_act(x, cond, packed, c_out=C_OUT)
    out = jax.block_until_ready(out)
    assert out.shape == (B, C_OUT)

    # Tight check against a reference using the same matmul precision (bf16
    # operands, f32 accumulation) as the kernel.
    ref_bf16 = mlp_ln_act_ref(x, cond, params, condition_bias=COND_BIAS,
                              mxu_dtype=jnp.bfloat16)
    assert jnp.allclose(out, ref_bf16, atol=1e-4, rtol=1e-4), \
        "mismatch vs bf16-matmul reference"

    # Loose sanity check against the full-f32 reference (bf16 MXU operand
    # rounding is the only difference).
    ref_f32 = mlp_ln_act_ref(x, cond, params, condition_bias=COND_BIAS)
    assert jnp.allclose(out, ref_f32, atol=1e-1, rtol=1e-1), \
        "mismatch vs f32 reference"

    print("KERNEL_OK")
</pallas_src>

<mosaic_0001>
module attributes {stable_mosaic.version = 11 : i64} {
  func.func @mlp_ln_act_kernel(%arg0: i32, %arg1: memref<8x48xf32, #tpu.memory_space<vmem>>, %arg2: memref<48x256xbf16, #tpu.memory_space<vmem>>, %arg3: memref<1x256xf32, #tpu.memory_space<vmem>>, %arg4: memref<1x128xf32, #tpu.memory_space<vmem>>, %arg5: memref<1x128xf32, #tpu.memory_space<vmem>>, %arg6: memref<8x128xf32, #tpu.memory_space<vmem>>) attributes {dimension_semantics = [#tpu.dimension_semantics<parallel>], iteration_bounds = array<i64: 1>, scalar_prefetch = 0 : i64, scratch_operands = 0 : i64, tpu.core_type = #tpu.core_type<tc>, window_params = [{transform_indices = @transform_0, window_bounds = array<i64: 8, 48>}, {pipeline_mode = #tpu.pipeline_mode<synchronous>, transform_indices = @transform_1, window_bounds = array<i64: 48, 256>}, {pipeline_mode = #tpu.pipeline_mode<synchronous>, transform_indices = @transform_2, window_bounds = array<i64: 1, 256>}, {pipeline_mode = #tpu.pipeline_mode<synchronous>, transform_indices = @transform_3, window_bounds = array<i64: 1, 128>}, {pipeline_mode = #tpu.pipeline_mode<synchronous>, transform_indices = @transform_4, window_bounds = array<i64: 1, 128>}, {transform_indices = @transform_5, window_bounds = array<i64: 8, 128>}]} {
    %c0 = arith.constant 0 : index
    %c0_0 = arith.constant 0 : index
    %0 = vector.load %arg1[%c0, %c0_0] : memref<8x48xf32, #tpu.memory_space<vmem>>, vector<8x48xf32>
    %1 = tpu.iota {dimensions = array<i32: 1>} : vector<8x48xi32>
    %c32_i32 = arith.constant 32 : i32
    %2 = vector.broadcast %c32_i32 : i32 to vector<8x48xi32>
    %3 = arith.cmpi sge, %1, %2 : vector<8x48xi32>
    %4 = arith.negf %0 : vector<8x48xf32>
    %5 = math.exp %4 : vector<8x48xf32>
    %cst = arith.constant 1.000000e+00 : f32
    %6 = vector.broadcast %cst : f32 to vector<8x48xf32>
    %7 = arith.addf %6, %5 : vector<8x48xf32>
    %8 = arith.divf %6, %7 : vector<8x48xf32>
    %9 = arith.mulf %0, %8 : vector<8x48xf32>
    %10 = arith.select %3, %9, %0 : vector<8x48xi1>, vector<8x48xf32>
    %11 = arith.truncf %10 : vector<8x48xf32> to vector<8x48xbf16>
    %c0_1 = arith.constant 0 : index
    %c0_2 = arith.constant 0 : index
    %12 = vector.load %arg2[%c0_1, %c0_2] : memref<48x256xbf16, #tpu.memory_space<vmem>>, vector<48x256xbf16>
    %cst_3 = arith.constant dense<0.000000e+00> : vector<8x256xf32>
    %13 = tpu.matmul %11, %12, %cst_3 {dimension_numbers = #tpu.dot_dimension_numbers<[1], [0], [0], [1], [0, 0, 1, 1], [], []>} : vector<8x48xbf16>, vector<48x256xbf16>, vector<8x256xf32> -> vector<8x256xf32>
    %c0_4 = arith.constant 0 : index
    %c0_5 = arith.constant 0 : index
    %14 = vector.load %arg3[%c0_4, %c0_5] : memref<1x256xf32, #tpu.memory_space<vmem>>, vector<1x256xf32>
    %15 = vector.broadcast %14 : vector<1x256xf32> to vector<8x256xf32>
    %16 = arith.addf %13, %15 : vector<8x256xf32>
    %17 = vector.extract_strided_slice %16 {offsets = [0, 0], sizes = [8, 128], strides = [1, 1]} : vector<8x256xf32> to vector<8x128xf32>
    %18 = vector.extract_strided_slice %16 {offsets = [0, 128], sizes = [8, 128], strides = [1, 1]} : vector<8x256xf32> to vector<8x128xf32>
    %19 = arith.mulf %17, %18 : vector<8x128xf32>
    %20 = tpu.iota {dimensions = array<i32: 1>} : vector<8x128xi32>
    %c32_i32_6 = arith.constant 32 : i32
    %21 = vector.broadcast %c32_i32_6 : i32 to vector<8x128xi32>
    %22 = arith.cmpi slt, %20, %21 : vector<8x128xi32>
    %cst_7 = arith.constant dense<0.000000e+00> : vector<8xf32>
    %23 = vector.multi_reduction <add>, %19, %cst_7 [1] : vector<8x128xf32> to vector<8xf32>
    %24 = vector.shape_cast %23 : vector<8xf32> to vector<8x1xf32>
    %cst_8 = arith.constant 3.125000e-02 : f32
    %25 = vector.broadcast %cst_8 : f32 to vector<8x1xf32>
    %26 = arith.mulf %24, %25 : vector<8x1xf32>
    %27 = vector.broadcast %26 : vector<8x1xf32> to vector<8x128xf32>
    %28 = arith.subf %19, %27 : vector<8x128xf32>
    %cst_9 = arith.constant 0.000000e+00 : f32
    %29 = vector.broadcast %cst_9 : f32 to vector<8x128xf32>
    %30 = arith.select %22, %28, %29 : vector<8x128xi1>, vector<8x128xf32>
    %31 = arith.mulf %30, %30 : vector<8x128xf32>
    %cst_10 = arith.constant dense<0.000000e+00> : vector<8xf32>
    %32 = vector.multi_reduction <add>, %31, %cst_10 [1] : vector<8x128xf32> to vector<8xf32>
    %33 = vector.shape_cast %32 : vector<8xf32> to vector<8x1xf32>
    %cst_11 = arith.constant 3.125000e-02 : f32
    %34 = vector.broadcast %cst_11 : f32 to vector<8x1xf32>
    %35 = arith.mulf %33, %34 : vector<8x1xf32>
    %cst_12 = arith.constant 9.99999974E-6 : f32
    %36 = vector.broadcast %cst_12 : f32 to vector<8x1xf32>
    %37 = arith.addf %35, %36 : vector<8x1xf32>
    %38 = math.rsqrt %37 : vector<8x1xf32>
    %39 = vector.broadcast %38 : vector<8x1xf32> to vector<8x128xf32>
    %40 = arith.mulf %30, %39 : vector<8x128xf32>
    %c0_13 = arith.constant 0 : index
    %c0_14 = arith.constant 0 : index
    %41 = vector.load %arg4[%c0_13, %c0_14] : memref<1x128xf32, #tpu.memory_space<vmem>>, vector<1x128xf32>
    %42 = vector.broadcast %41 : vector<1x128xf32> to vector<8x128xf32>
    %43 = arith.mulf %40, %42 : vector<8x128xf32>
    %c0_15 = arith.constant 0 : index
    %c0_16 = arith.constant 0 : index
    %44 = vector.load %arg5[%c0_15, %c0_16] : memref<1x128xf32, #tpu.memory_space<vmem>>, vector<1x128xf32>
    %45 = vector.broadcast %44 : vector<1x128xf32> to vector<8x128xf32>
    %46 = arith.addf %43, %45 : vector<8x128xf32>
    %47 = arith.negf %46 : vector<8x128xf32>
    %48 = math.exp %47 : vector<8x128xf32>
    %cst_17 = arith.constant 1.000000e+00 : f32
    %49 = vector.broadcast %cst_17 : f32 to vector<8x128xf32>
    %50 = arith.addf %49, %48 : vector<8x128xf32>
    %51 = arith.divf %49, %50 : vector<8x128xf32>
    %52 = arith.mulf %46, %51 : vector<8x128xf32>
    %c0_18 = arith.constant 0 : index
    %c0_19 = arith.constant 0 : index
    %53 = vector.load %arg6[%c0_18, %c0_19] : memref<8x128xf32, #tpu.memory_space<vmem>>, vector<8x128xf32>
    tpu.vector_store %arg6[%c0_18, %c0_19], %52 {strides = array<i32>} : memref<8x128xf32, #tpu.memory_space<vmem>>, vector<8x128xf32>,
    return
  }
  func.func @transform_0(%arg0: i32) -> (i32, i32) {
    %c0_i32 = arith.constant 0 : i32
    %c0_i32_0 = arith.constant 0 : i32
    return %arg0, %c0_i32 : i32, i32
  }
  func.func @transform_1(%arg0: i32) -> (i32, i32) {
    %c0_i32 = arith.constant 0 : i32
    %c0_i32_0 = arith.constant 0 : i32
    %c0_i32_1 = arith.constant 0 : i32
    return %c0_i32, %c0_i32_0 : i32, i32
  }
  func.func @transform_2(%arg0: i32) -> (i32, i32) {
    %c0_i32 = arith.constant 0 : i32
    %c0_i32_0 = arith.constant 0 : i32
    %c0_i32_1 = arith.constant 0 : i32
    return %c0_i32, %c0_i32_0 : i32, i32
  }
  func.func @transform_3(%arg0: i32) -> (i32, i32) {
    %c0_i32 = arith.constant 0 : i32
    %c0_i32_0 = arith.constant 0 : i32
    %c0_i32_1 = arith.constant 0 : i32
    return %c0_i32, %c0_i32_0 : i32, i32
  }
  func.func @transform_4(%arg0: i32) -> (i32, i32) {
    %c0_i32 = arith.constant 0 : i32
    %c0_i32_0 = arith.constant 0 : i32
    %c0_i32_1 = arith.constant 0 : i32
    return %c0_i32, %c0_i32_0 : i32, i32
  }
  func.func @transform_5(%arg0: i32) -> (i32, i32) {
    %c0_i32 = arith.constant 0 : i32
    %c0_i32_0 = arith.constant 0 : i32
    return %arg0, %c0_i32 : i32, i32
  }
}

</mosaic_0001>

<llo_original>
// kernel: tpu_custom_call.1
$region0: #{tpu_custom_call.1}
  #allocation0 [shape = 'u32[]', space=smem, size = 0x4, offset = 0x4, fixed_abs, tag = 'smem constant byte address 0x4 - core index']
  #allocation1 [shape = 'u32[144,128]{1,0:T(1,128)}', space=vmem, size = 0x12000, scoped, tag = 'internal scratch']
  %s0 = inlined_call_operand.hbm [shape: f32[8,48], index: 0, kind: input, shape index: {}]
  %s1 = inlined_call_operand.hbm [shape: bf16[48,256], index: 1, kind: input, shape index: {}]
  %s2 = inlined_call_operand.vmem [shape: f32[1,256], index: 2, kind: input, shape index: {}]
  %s3 = inlined_call_operand.vmem [shape: f32[1,128], index: 3, kind: input, shape index: {}]
  %s4 = inlined_call_operand.vmem [shape: f32[1,128], index: 4, kind: input, shape index: {}]
  %s5 = inlined_call_operand.hbm [shape: f32[8,128], index: 5, kind: output, shape index: {}]
  %s6 = sld [smem:[#allocation0]]
  $region38: #{tpu_custom_call.1} parent=0
    _
  %s8 = ssub.s32 1, %s6
  %s9 = scalar_select 0, %s8, %s6
  $region1: #{tpu_custom_call.1} parent=0
    #allocation2 [shape = 'u8[4096]{0}', space=vmem, size = 0x1000, scoped, tag = 'input window, operand 0, single buffered']
    #allocation3 [shape = 's32[1]{0}', space=sflag, size = 0x4, scoped, tag = 'scoped memory for tpu_custom_call.1']
    #allocation4 [shape = 's32[1]{0}', space=sflag, size = 0x4, scoped, tag = 'scoped memory for tpu_custom_call.1']
    #allocation5 [shape = 'u8[24576]{0}', space=vmem, size = 0x6000, scoped, tag = 'input window, operand 1, single buffered']
    #allocation6 [shape = 's32[1]{0}', space=sflag, size = 0x4, scoped, tag = 'scoped memory for tpu_custom_call.1']
    #allocation7 [shape = 'u8[4096]{0}', space=vmem, size = 0x1000, scoped, tag = 'output window, operand 0, single buffered']
    %10 = vsyncpa [#allocation3], 0
    %11 = vsyncpa [#allocation6], 0
    %12 = vsyncpa [#allocation4], 0
    // Predicated region
    $region2: #{tpu_custom_call.1} parent=1 // pred_check
      _
    $region3: #{tpu_custom_call.1} parent=1 // pred_check_branch
      %14 = sbr.rel (0) target = $region5
    $region4: #{tpu_custom_call.1} parent=1 // pred_region
      %s16 = ssub.s32 128, 128
      %17 = vsyncadd [#allocation3], %s16
      %s19 = sshll.u32 [#allocation2], 4
      %s20 = int_to_ptr.vmem [resolvable:$true] %s19
      %22 = dma.hbm_to_vmem [thread:$0]  %s0, 128, %s20, [#allocation3]
    $region5: #{tpu_custom_call.1} parent=1 // pred_fallthru
      _
    // Predicated region
    $region6: #{tpu_custom_call.1} parent=1 // pred_check
      _
    $region7: #{tpu_custom_call.1} parent=1 // pred_check_branch
      %24 = sbr.rel (0) target = $region9
    $region8: #{tpu_custom_call.1} parent=1 // pred_region
      %s26 = ssub.s32 768, 768
      %27 = vsyncadd [#allocation6], %s26
      %s28 = sshll.u32 [#allocation5], 4
      %s29 = int_to_ptr.vmem [resolvable:$true] %s28
      %34 = dma.hbm_to_vmem [thread:$0]  %s1, 768, %s29, [#allocation6], 128, 128, 8
    $region9: #{tpu_custom_call.1} parent=1 // pred_fallthru
      _
    // Predicated region
    $region10: #{tpu_custom_call.1} parent=1 // pred_check
      _
    $region11: #{tpu_custom_call.1} parent=1 // pred_check_branch
      %36 = sbr.rel (0) target = $region13
    $region12: #{tpu_custom_call.1} parent=1 // pred_region
      _
    $region13: #{tpu_custom_call.1} parent=1 // pred_fallthru
      _
    // Predicated region
    $region14: #{tpu_custom_call.1} parent=1 // pred_check
      _
    $region15: #{tpu_custom_call.1} parent=1 // pred_check_branch
      %38 = sbr.rel (0) target = $region17
    $region16: #{tpu_custom_call.1} parent=1 // pred_region
      _
    $region17: #{tpu_custom_call.1} parent=1 // pred_fallthru
      _
    // Predicated region
    $region18: #{tpu_custom_call.1} parent=1 // pred_check
      _
    $region19: #{tpu_custom_call.1} parent=1 // pred_check_branch
      %40 = sbr.rel (0) target = $region21
    $region20: #{tpu_custom_call.1} parent=1 // pred_region
      _
    $region21: #{tpu_custom_call.1} parent=1 // pred_fallthru
      _
    // Predicated region
    $region22: #{tpu_custom_call.1} parent=1 // pred_check
      _
    $region23: #{tpu_custom_call.1} parent=1 // pred_check_branch
      %42 = sbr.rel (0) target = $region25
    $region24: #{tpu_custom_call.1} parent=1 // pred_region
      %43 = dma.done [#allocation3], 128
    $region25: #{tpu_custom_call.1} parent=1 // pred_fallthru
      _
    // Predicated region
    $region26: #{tpu_custom_call.1} parent=1 // pred_check
      _
    $region27: #{tpu_custom_call.1} parent=1 // pred_check_branch
      %45 = sbr.rel (0) target = $region29
    $region28: #{tpu_custom_call.1} parent=1 // pred_region
      %46 = dma.done [#allocation6], 768
    $region29: #{tpu_custom_call.1} parent=1 // pred_fallthru
      _
    %v48 = vld [vmem:[#allocation2] sm:$0xff]
    %v49 = vlaneseq
    %v50 = vand.u32 %v49, 127
    %vm51 = vcmp.ge.s32.totalorder %v50, 32
    %v52 = vxor.u32 %v48, 2147483648
    %v53 = vmul.f32 %v52, 1.442695
    %v54 = vpow.pop %v53
    %v55 = vadd.f32 %v54, 1.0
    %v56 = vrcp.pop %v55
    %v57 = vmul.f32 1.0, %v56
    %v58 = vmul.f32 %v48, %v57
    %v59 = vsel %vm51, %v58, %v48
    %v60 = vpack.c.bf16 %v59, %v59
    %v61 = vld [vmem:[#allocation5] sm:$0xff]
    %v62 = vld [vmem:[#allocation5 + $0x8] sm:$0xff]
    %v63 = vld [vmem:[#allocation5 + $0x10] sm:$0xff]
    %v64 = vld [vmem:[#allocation5 + $0x18] sm:$0xff]
    %v65 = vld [vmem:[#allocation5 + $0x20] sm:$0xff]
    %v66 = vld [vmem:[#allocation5 + $0x28] sm:$0xff]
    %v67 = vld [vmem:[%s2] sm:$0x3]
    %v69 = vlaneseq
    %v70 = vshrl.u32 %v69, 7
    %v71 = vsub.s32 0, %v70
    %v72 = vrot.slane %v67, %v71
    %v73 = vlaneseq
    %v74 = vshrl.u32 %v73, 7
    %v75 = vsub.s32 1, %v74
    %v76 = vrot.slane %v67, %v75
    %v85 = vunpack.c.l.b16 %v61
    %v86 = vunpack.c.h.b16 %v61
    %v87 = vunpack.c.l.b16 %v62
    %v88 = vunpack.c.h.b16 %v62
    %v89 = vunpack.c.l.b16 %v63
    %v90 = vunpack.c.h.b16 %v63
    %v91 = vunpack.c.l.b16 %v64
    %v92 = vunpack.c.h.b16 %v64
    %v93 = vunpack.c.l.b16 %v65
    %v94 = vunpack.c.h.b16 %v65
    %v95 = vunpack.c.l.b16 %v66
    %v96 = vunpack.c.h.b16 %v66
    %v97 = vpack.c.b16 %v87, %v85
    %v98 = vpack.c.b16 %v88, %v86
    %v99 = vpack.c.b16 %v91, %v89
    %v100 = vpack.c.b16 %v92, %v90
    %v101 = vpack.c.b16 %v95, %v93
    %v102 = vpack.c.b16 %v96, %v94
    %vm109 = vcmask 392192
    %v111 = vsel %vm109, %v60, 0
    %113 = vmatprep.subr.bf16.mxu0 0
    %114 = vmatpush1.bf16.msra.mxu0 0
    %115 = vmatprep.subr.bf16.mxu0 0
    %116 = vmatpush1.bf16.msra.mxu0 0
    %117 = vmatprep.subr.bf16.mxu0 0
    %118 = vmatpush1.bf16.msra.mxu0 0
    %119 = vmatprep.subr.bf16.mxu0 0
    %120 = vmatpush1.bf16.msra.mxu0 0
    %121 = vmatprep.subr.bf16.mxu0 0
    %122 = vmatpush1.bf16.msra.mxu0 0
    %123 = vmatprep.subr.bf16.mxu0 %v102
    %124 = vmatpush1.bf16.msra.mxu0 %v101
    %125 = vmatprep.subr.bf16.mxu0 %v100
    %126 = vmatpush1.bf16.msra.mxu0 %v99
    %127 = vmatprep.subr.bf16.mxu0 %v98
    %128 = vmatpush1.bf16.msra.mxu0 %v97
    %129 = vmatprep.subr.bf16.mxu0 0
    %130 = vmatpush2.bf16.msra.mxu0 0
    %131 = vmatprep.subr.bf16.mxu0 0
    %132 = vmatpush2.bf16.msra.mxu0 0
    %133 = vmatprep.subr.bf16.mxu0 0
    %134 = vmatpush2.bf16.msra.mxu0 0
    %135 = vmatprep.subr.bf16.mxu0 0
    %136 = vmatpush2.bf16.msra.mxu0 0
    %137 = vmatprep.subr.bf16.mxu0 0
    %138 = vmatpush2.bf16.msra.mxu0 0
    %139 = vmatprep.subr.bf16.mxu0 0
    %140 = vmatpush2.bf16.msra.mxu0 0
    %141 = vmatprep.subr.bf16.mxu0 0
    %142 = vmatpush2.bf16.msra.mxu0 0
    %143 = vmatprep.subr.bf16.mxu0 0
    %144 = vmatpush2.bf16.msra.mxu0 0
    %145 = vmatprep.mubr.bf16.mxu0 0
    %146 = vmatmul.mubr.bf16.gmra.mxu0 %v111
    %v147 = vpop.f32.mrf.mxu0
    %v148 = vadd.f32 %v72, %v147
    %v149 = vpop.f32.mrf.mxu0
    %v150 = vadd.f32 %v76, %v149
    %v151 = vpop.f32.mrf.mxu0
    %v152 = vpop.f32.mrf.mxu0
    %153 = vdwg.mxu0
    %v154 = vmul.f32 %v148, %v150
    %vm155 = vcmp.lt.s32.totalorder %v50, 32
    %156 = vadd.xlane.f32.xlu0 %v154
    %v157 = vpop.xlane.xlu0 %156
    %v158 = vmul.f32 %v157, 0.03125
    %v159 = vsub.f32 %v154, %v158
    %v160 = vsel %vm155, %v159, 0.0
    %v161 = vmul.f32 %v160, %v160
    %162 = vadd.xlane.f32.xlu0 %v161
    %v163 = vpop.xlane.xlu0 %162
    %v164 = vmul.f32 %v163, 0.03125
    %v165 = vadd.f32 %v164, 1e-05
    %v166 = vrsqrt.pop %v165
    %v167 = vmul.f32 %v160, %v166
    %v168 = vld [vmem:[%s3] sm:$0x1]
    %v170 = vlaneseq
    %v171 = vshrl.u32 %v170, 7
    %v172 = vsub.s32 0, %v171
    %v173 = vrot.slane %v168, %v172
    %v175 = vmul.f32 %v167, %v173
    %v176 = vld [vmem:[%s4] sm:$0x1]
    %v178 = vlaneseq
    %v179 = vshrl.u32 %v178, 7
    %v180 = vsub.s32 0, %v179
    %v181 = vrot.slane %v176, %v180
    %v183 = vadd.f32 %v175, %v181
    %v184 = vxor.u32 %v183, 2147483648
    %v185 = vmul.f32 %v184, 1.442695
    %v186 = vpow.pop %v185
    %v187 = vadd.f32 %v186, 1.0
    %v188 = vrcp.pop %v187
    %v189 = vmul.f32 1.0, %v188
    %v190 = vmul.f32 %v183, %v189
    %191 = vst [vmem:[#allocation7] sm:$0xff] %v190
    // Predicated region
    $region30: #{tpu_custom_call.1} parent=1 // pred_check
      _
    $region31: #{tpu_custom_call.1} parent=1 // pred_check_branch
      %193 = sbr.rel (0) target = $region33
    $region32: #{tpu_custom_call.1} parent=1 // pred_region
      %s195 = ssub.s32 128, 128
      %196 = vsyncadd [#allocation4], %s195
      %s198 = sshll.u32 [#allocation7], 4
      %s199 = int_to_ptr.vmem [resolvable:$true] %s198
      %201 = dma.vmem_to_hbm [thread:$0]  %s199, 128, %s5, [#allocation4]
    $region33: #{tpu_custom_call.1} parent=1 // pred_fallthru
      _
    // Predicated region
    $region34: #{tpu_custom_call.1} parent=1 // pred_check
      _
    $region35: #{tpu_custom_call.1} parent=1 // pred_check_branch
      %203 = sbr.rel (0) target = $region37
    $region36: #{tpu_custom_call.1} parent=1 // pred_region
      %204 = dma.done [#allocation4], 128
    $region37: #{tpu_custom_call.1} parent=1 // pred_fallthru
      _
    %205 = vsyncpa [#allocation3], 1
    %206 = vsyncpa [#allocation6], 1
    %207 = vsyncpa [#allocation4], 1

</llo_original>
